<compile_context>
chip_gen: v5e
topology: v5e:2x2
jax: 0.10.0
libtpu: 0.0.40
codegen_flags: <defaults>
</compile_context>

<pallas_src>
import jax
import jax.numpy as jnp
from jax.experimental import pallas as pl
from jax.experimental.pallas import tpu as pltpu


def _wmse_partial_kernel(pred_ref, gt_ref, w_ref, partial_ref):
    # pred_ref / gt_ref: (TM, HW) row tile; w_ref: (TM, 1); partial_ref: (1, HW)
    pred = jax.nn.sigmoid(pred_ref[...].astype(jnp.float32))  # sigmoid on pred only
    gt = gt_ref[...].astype(jnp.float32)
    w = w_ref[...].astype(jnp.float32)
    w2 = w * w                                  # tiny (TM, 1) tile
    d = pred - gt
    contrib = (d * d) * w2                      # (TM, HW), elementwise
    # Sublane-axis reduction only (VPU adds across row tiles + one XLU sublane
    # reduce per lane group); final scalar reduction is done outside the kernel.
    partial_ref[...] = jnp.sum(contrib, axis=0, keepdims=True)


def _choose_row_tile(num_rows, hw):
    """Pick a row-tile size: big enough to amortize per-step overhead, small
    enough that 2 inputs x 2 pipeline buffers fit scoped VMEM on all
    generations (v7x has only 64 MiB physical / 32 MiB scoped default)."""
    # Cap each input tile at ~4 MiB (f32 terms) -> ~16 MiB of double-buffered tiles.
    cap_rows = max(8, ((4 * 1024 * 1024) // max(1, hw * 4)) // 8 * 8)
    tm_max = min(512, cap_rows)
    if num_rows <= tm_max:
        return num_rows, 0                      # single tile; block == full dim
    start = tm_max - (tm_max % 8)
    for cand in range(start, 7, -8):            # multiples of 8 (layout constraint)
        if num_rows % cand == 0:
            return cand, 0
    # No clean divisor: pad rows (padded rows get zero weight -> zero contribution).
    tm = min(128, start)
    pad = (-num_rows) % tm
    return tm, pad


def weighted_mse_loss(output, target, target_weight):
    """output, target: (B, J, H, W); target_weight: (B, J, 1). Returns scalar f32."""
    B, J, H, W = output.shape
    HW = H * W
    R = B * J

    # Free contiguous views -- no transposes, no extra HBM traffic.
    pred = output.reshape(R, HW)
    gt = target.reshape(R, HW)
    w = target_weight.reshape(R, 1)

    tm, pad = _choose_row_tile(R, HW)
    if pad:
        pred = jnp.pad(pred, ((0, pad), (0, 0)))
        gt = jnp.pad(gt, ((0, pad), (0, 0)))
        w = jnp.pad(w, ((0, pad), (0, 0)))      # zero weight => zero contribution
    n_tiles = (R + pad) // tm

    itemsize = jnp.dtype(output.dtype).itemsize
    tile_bytes = tm * HW * itemsize
    # 2 inputs x 2 pipeline buffers + weights + output partials + headroom.
    vmem_limit = int(min(max(4 * tile_bytes + (2 << 20), 16 << 20), 48 << 20))

    partials = pl.pallas_call(
        _wmse_partial_kernel,
        out_shape=jax.ShapeDtypeStruct((n_tiles, HW), jnp.float32),
        grid_spec=pltpu.PrefetchScalarGridSpec(
            num_scalar_prefetch=0,
            grid=(n_tiles,),
            in_specs=[
                pl.BlockSpec((tm, HW), lambda i: (i, 0)),
                pl.BlockSpec((tm, HW), lambda i: (i, 0)),
                pl.BlockSpec((tm, 1), lambda i: (i, 0)),
            ],
            out_specs=pl.BlockSpec((1, HW), lambda i: (i, 0)),
        ),
        compiler_params=pltpu.CompilerParams(
            dimension_semantics=("parallel",),  # independent tiles -> megacore-safe
            vmem_limit_bytes=vmem_limit,
        ),
    )(pred, gt, w)

    inv_denom = 1.0 / float(J * B * HW)         # per-joint MSE mean, then / num_joints
    return jnp.sum(partials, dtype=jnp.float32) * jnp.float32(inv_denom)


def weighted_mse_loss_ref(output, target, target_weight):
    B, J, H, W = output.shape
    pred = jax.nn.sigmoid(output.reshape(B, J, -1).astype(jnp.float32))
    gt = target.reshape(B, J, -1).astype(jnp.float32)
    w = target_weight.astype(jnp.float32)       # (B, J, 1)
    per_joint = jnp.mean(((pred - gt) * w) ** 2, axis=(0, 2))  # (J,)
    return jnp.sum(per_joint) / J


if __name__ == "__main__":
    B, J, H, W = 2, 4, 16, 16
    key = jax.random.PRNGKey(0)
    k1, k2, k3 = jax.random.split(key, 3)
    output = jax.random.normal(k1, (B, J, H, W), dtype=jnp.float32)
    target = jax.random.uniform(k2, (B, J, H, W), dtype=jnp.float32)
    target_weight = jax.random.uniform(k3, (B, J, 1), dtype=jnp.float32)

    loss = jax.block_until_ready(weighted_mse_loss(output, target, target_weight))
    ref = jax.block_until_ready(weighted_mse_loss_ref(output, target, target_weight))
    assert jnp.allclose(loss, ref, rtol=1e-5, atol=1e-6), (loss, ref)
    print("KERNEL_OK")
</pallas_src>

<mosaic_0001>
module attributes {stable_mosaic.version = 11 : i64} {
  func.func @_wmse_partial_kernel(%arg0: i32, %arg1: memref<8x256xf32, #tpu.memory_space<vmem>>, %arg2: memref<8x256xf32, #tpu.memory_space<vmem>>, %arg3: memref<8x1xf32, #tpu.memory_space<vmem>>, %arg4: memref<1x256xf32, #tpu.memory_space<vmem>>) attributes {dimension_semantics = [#tpu.dimension_semantics<parallel>], iteration_bounds = array<i64: 1>, scalar_prefetch = 0 : i64, scratch_operands = 0 : i64, tpu.core_type = #tpu.core_type<tc>, window_params = [{transform_indices = @transform_0, window_bounds = array<i64: 8, 256>}, {transform_indices = @transform_1, window_bounds = array<i64: 8, 256>}, {transform_indices = @transform_2, window_bounds = array<i64: 8, 1>}, {transform_indices = @transform_3, window_bounds = array<i64: 1, 256>}]} {
    %c0 = arith.constant 0 : index
    %c0_0 = arith.constant 0 : index
    %0 = vector.load %arg1[%c0, %c0_0] : memref<8x256xf32, #tpu.memory_space<vmem>>, vector<8x256xf32>
    %1 = arith.negf %0 : vector<8x256xf32>
    %2 = math.exp %1 : vector<8x256xf32>
    %cst = arith.constant 1.000000e+00 : f32
    %3 = vector.broadcast %cst : f32 to vector<8x256xf32>
    %4 = arith.addf %3, %2 : vector<8x256xf32>
    %5 = arith.divf %3, %4 : vector<8x256xf32>
    %c0_1 = arith.constant 0 : index
    %c0_2 = arith.constant 0 : index
    %6 = vector.load %arg2[%c0_1, %c0_2] : memref<8x256xf32, #tpu.memory_space<vmem>>, vector<8x256xf32>
    %c0_3 = arith.constant 0 : index
    %c0_4 = arith.constant 0 : index
    %7 = vector.load %arg3[%c0_3, %c0_4] : memref<8x1xf32, #tpu.memory_space<vmem>>, vector<8x1xf32>
    %8 = arith.mulf %7, %7 : vector<8x1xf32>
    %9 = arith.subf %5, %6 : vector<8x256xf32>
    %10 = arith.mulf %9, %9 : vector<8x256xf32>
    %11 = vector.broadcast %8 : vector<8x1xf32> to vector<8x256xf32>
    %12 = arith.mulf %10, %11 : vector<8x256xf32>
    %cst_5 = arith.constant dense<0.000000e+00> : vector<256xf32>
    %13 = vector.multi_reduction <add>, %12, %cst_5 [0] : vector<8x256xf32> to vector<256xf32>
    %14 = vector.shape_cast %13 : vector<256xf32> to vector<1x256xf32>
    %c0_6 = arith.constant 0 : index
    %c0_7 = arith.constant 0 : index
    %15 = vector.load %arg4[%c0_6, %c0_7] : memref<1x256xf32, #tpu.memory_space<vmem>>, vector<1x256xf32>
    tpu.vector_store %arg4[%c0_6, %c0_7], %14 {strides = array<i32>} : memref<1x256xf32, #tpu.memory_space<vmem>>, vector<1x256xf32>,
    return
  }
  func.func @transform_0(%arg0: i32) -> (i32, i32) {
    %c0_i32 = arith.constant 0 : i32
    %c0_i32_0 = arith.constant 0 : i32
    return %arg0, %c0_i32 : i32, i32
  }
  func.func @transform_1(%arg0: i32) -> (i32, i32) {
    %c0_i32 = arith.constant 0 : i32
    %c0_i32_0 = arith.constant 0 : i32
    return %arg0, %c0_i32 : i32, i32
  }
  func.func @transform_2(%arg0: i32) -> (i32, i32) {
    %c0_i32 = arith.constant 0 : i32
    %c0_i32_0 = arith.constant 0 : i32
    return %arg0, %c0_i32 : i32, i32
  }
  func.func @transform_3(%arg0: i32) -> (i32, i32) {
    %c0_i32 = arith.constant 0 : i32
    %c0_i32_0 = arith.constant 0 : i32
    return %arg0, %c0_i32 : i32, i32
  }
}

</mosaic_0001>

<llo_original>
// kernel: tpu_custom_call.1
$region0: #{tpu_custom_call.1}
  #allocation0 [shape = 'u32[]', space=smem, size = 0x4, offset = 0x4, fixed_abs, tag = 'smem constant byte address 0x4 - core index']
  #allocation1 [shape = 'u32[72,128]{1,0:T(1,128)}', space=vmem, size = 0x9000, scoped, tag = 'internal scratch']
  %s0 = inlined_call_operand.hbm [shape: f32[8,256], index: 0, kind: input, shape index: {}]
  %s1 = inlined_call_operand.hbm [shape: f32[8,256], index: 1, kind: input, shape index: {}]
  %s2 = inlined_call_operand.vmem [shape: f32[8,1], index: 2, kind: input, shape index: {}]
  %s3 = inlined_call_operand.hbm [shape: f32[1,256], index: 3, kind: output, shape index: {}]
  %s4 = sld [smem:[#allocation0]]
  $region30: #{tpu_custom_call.1} parent=0
    _
  %s6 = ssub.s32 1, %s4
  %s7 = scalar_select 0, %s6, %s4
  $region1: #{tpu_custom_call.1} parent=0
    #allocation2 [shape = 'u8[8192]{0}', space=vmem, size = 0x2000, scoped, tag = 'input window, operand 0, single buffered']
    #allocation3 [shape = 's32[1]{0}', space=sflag, size = 0x4, scoped, tag = 'scoped memory for tpu_custom_call.1']
    #allocation4 [shape = 's32[1]{0}', space=sflag, size = 0x4, scoped, tag = 'scoped memory for tpu_custom_call.1']
    #allocation5 [shape = 'u8[8192]{0}', space=vmem, size = 0x2000, scoped, tag = 'input window, operand 1, single buffered']
    #allocation6 [shape = 's32[1]{0}', space=sflag, size = 0x4, scoped, tag = 'scoped memory for tpu_custom_call.1']
    #allocation7 [shape = 'u8[1024]{0}', space=vmem, size = 0x400, scoped, tag = 'output window, operand 0, single buffered']
    %8 = vsyncpa [#allocation3], 0
    %9 = vsyncpa [#allocation6], 0
    %10 = vsyncpa [#allocation4], 0
    // Predicated region
    $region2: #{tpu_custom_call.1} parent=1 // pred_check
      _
    $region3: #{tpu_custom_call.1} parent=1 // pred_check_branch
      %12 = sbr.rel (0) target = $region5
    $region4: #{tpu_custom_call.1} parent=1 // pred_region
      %14 = vsyncadd [#allocation3], 0
      %s16 = sshll.u32 %s0, 4
      %s17 = int_to_ptr.hbm [resolvable:$true] %s16
      %s18 = sshll.u32 [#allocation2], 4
      %s19 = int_to_ptr.vmem [resolvable:$true] %s18
      %21 = dma.hbm_to_vmem [thread:$0]  %s17, 256, %s19, [#allocation3]
    $region5: #{tpu_custom_call.1} parent=1 // pred_fallthru
      _
    // Predicated region
    $region6: #{tpu_custom_call.1} parent=1 // pred_check
      _
    $region7: #{tpu_custom_call.1} parent=1 // pred_check_branch
      %23 = sbr.rel (0) target = $region9
    $region8: #{tpu_custom_call.1} parent=1 // pred_region
      %25 = vsyncadd [#allocation6], 0
      %s27 = sshll.u32 %s1, 4
      %s28 = int_to_ptr.hbm [resolvable:$true] %s27
      %s29 = sshll.u32 [#allocation5], 4
      %s30 = int_to_ptr.vmem [resolvable:$true] %s29
      %32 = dma.hbm_to_vmem [thread:$0]  %s28, 256, %s30, [#allocation6]
    $region9: #{tpu_custom_call.1} parent=1 // pred_fallthru
      _
    // Predicated region
    $region10: #{tpu_custom_call.1} parent=1 // pred_check
      _
    $region11: #{tpu_custom_call.1} parent=1 // pred_check_branch
      %34 = sbr.rel (0) target = $region13
    $region12: #{tpu_custom_call.1} parent=1 // pred_region
      _
    $region13: #{tpu_custom_call.1} parent=1 // pred_fallthru
      _
    // Predicated region
    $region14: #{tpu_custom_call.1} parent=1 // pred_check
      _
    $region15: #{tpu_custom_call.1} parent=1 // pred_check_branch
      %36 = sbr.rel (0) target = $region17
    $region16: #{tpu_custom_call.1} parent=1 // pred_region
      %38 = dma.done [#allocation3], 256
    $region17: #{tpu_custom_call.1} parent=1 // pred_fallthru
      _
    // Predicated region
    $region18: #{tpu_custom_call.1} parent=1 // pred_check
      _
    $region19: #{tpu_custom_call.1} parent=1 // pred_check_branch
      %40 = sbr.rel (0) target = $region21
    $region20: #{tpu_custom_call.1} parent=1 // pred_region
      %42 = dma.done [#allocation6], 256
    $region21: #{tpu_custom_call.1} parent=1 // pred_fallthru
      _
    %v43 = vld [vmem:[#allocation2] sm:$0xff]
    %v44 = vld [vmem:[#allocation2 + $0x8] sm:$0xff]
    %v45 = vxor.u32 %v43, 2147483648
    %v46 = vxor.u32 %v44, 2147483648
    %v47 = vmul.f32 %v45, 1.442695
    %v48 = vpow.pop %v47
    %v49 = vmul.f32 %v46, 1.442695
    %v50 = vpow.pop %v49
    %v51 = vadd.f32 %v48, 1.0
    %v52 = vadd.f32 %v50, 1.0
    %v53 = vrcp.pop %v51
    %v54 = vmul.f32 %v51, %v53
    %v55 = vsub.f32 1.0, %v54
    %v56 = vmul.f32 %v53, %v55
    %v57 = vadd.f32 %v53, %v56
    %vm58 = vweird.f32 %v51
    %vm59 = vweird.f32 %v53
    %vm60 = vmor %vm58, %vm59
    %v61 = vsel %vm60, %v53, %v57
    %v62 = vand.u32 2147483647, %v51
    %vm63 = vcmp.eq.f32.partialorder %v62, 8.507059e+37
    %v64 = vand.u32 %v51, 2147483648
    %v65 = vor.u32 1.1754944e-38, %v64
    %v66 = vsel %vm63, %v65, %v61
    %v67 = vmul.f32 1.0, %v66
    %v68 = vrcp.pop %v52
    %v69 = vmul.f32 %v52, %v68
    %v70 = vsub.f32 1.0, %v69
    %v71 = vmul.f32 %v68, %v70
    %v72 = vadd.f32 %v68, %v71
    %vm73 = vweird.f32 %v52
    %vm74 = vweird.f32 %v68
    %vm75 = vmor %vm73, %vm74
    %v76 = vsel %vm75, %v68, %v72
    %v77 = vand.u32 2147483647, %v52
    %vm78 = vcmp.eq.f32.partialorder %v77, 8.507059e+37
    %v79 = vand.u32 %v52, 2147483648
    %v80 = vor.u32 1.1754944e-38, %v79
    %v81 = vsel %vm78, %v80, %v76
    %v82 = vmul.f32 1.0, %v81
    %v83 = vld [vmem:[#allocation5] sm:$0xff]
    %v84 = vld [vmem:[#allocation5 + $0x8] sm:$0xff]
    %v85 = vld [vmem:[%s2] sm:$0xff]
    %v86 = vmul.f32 %v85, %v85
    %v87 = vsub.f32 %v67, %v83
    %v88 = vsub.f32 %v82, %v84
    %v89 = vmul.f32 %v87, %v87
    %v90 = vmul.f32 %v88, %v88
    %92 = vset.pattern.permute.xlu0 0
    %93 = vperm.xlu0 %92, %v86
    %v94 = vpop.permute.xlu0 %93
    %v96 = vmul.f32 %v89, %v94
    %v97 = vmul.f32 %v90, %v94
    %v98 = vrot.slane %v96, 4
    %v99 = vadd.f32 %v96, %v98
    %v100 = vrot.slane %v99, 2
    %v101 = vadd.f32 %v99, %v100
    %v102 = vrot.slane %v101, 1
    %v103 = vadd.f32 %v101, %v102
    %v104 = vrot.slane %v97, 4
    %v105 = vadd.f32 %v97, %v104
    %v106 = vrot.slane %v105, 2
    %v107 = vadd.f32 %v105, %v106
    %v108 = vrot.slane %v107, 1
    %v109 = vadd.f32 %v107, %v108
    %v112 = vrot.slane %v109, 7
    %vm113 = vcmask 1040384
    %v114 = vsel %vm113, %v103, %v112
    %v116 = vlaneseq
    %vm117 = vcmp.ge.s32.totalorder %v116, 0
    %vm118 = vcmp.lt.s32.totalorder %v116, 256
    %vm119 = vmand %vm117, %vm118
    %120 = vst.msk [vmem:[#allocation7] sm:$0x3] %vm119, %v114
    // Predicated region
    $region22: #{tpu_custom_call.1} parent=1 // pred_check
      _
    $region23: #{tpu_custom_call.1} parent=1 // pred_check_branch
      %122 = sbr.rel (0) target = $region25
    $region24: #{tpu_custom_call.1} parent=1 // pred_region
      %124 = vsyncadd [#allocation4], 0
      %s126 = sshll.u32 [#allocation7], 4
      %s127 = int_to_ptr.vmem [resolvable:$true] %s126
      %s128 = sshll.u32 %s3, 4
      %s129 = int_to_ptr.hbm [resolvable:$true] %s128
      %131 = dma.vmem_to_hbm [thread:$0]  %s127, 32, %s129, [#allocation4]
    $region25: #{tpu_custom_call.1} parent=1 // pred_fallthru
      _
    // Predicated region
    $region26: #{tpu_custom_call.1} parent=1 // pred_check
      _
    $region27: #{tpu_custom_call.1} parent=1 // pred_check_branch
      %133 = sbr.rel (0) target = $region29
    $region28: #{tpu_custom_call.1} parent=1 // pred_region
      %135 = dma.done [#allocation4], 32
    $region29: #{tpu_custom_call.1} parent=1 // pred_fallthru
      _
    %136 = vsyncpa [#allocation3], 1
    %137 = vsyncpa [#allocation6], 1
    %138 = vsyncpa [#allocation4], 1

</llo_original>
